<compile_context>
chip_gen: v6e
topology: v6e:2x2x1
jax: 0.10.0
libtpu: 0.0.40
codegen_flags: <defaults>
</compile_context>

<pallas_src>
import jax
import jax.numpy as jnp
from jax.experimental import pallas as pl
from jax.experimental.pallas import tpu as pltpu

HIDDEN = 16  # fixed by the module definition (nn.Linear(input_neurons, 16))


def position_kernel(xT_ref, w1_ref, b1_ref, w2_ref, b2_ref, oT_ref):
    # Transposed formulation: batch on the lane axis, Out on the sublane axis.
    x_t = xT_ref[...]                       # (In, TB)
    w1 = w1_ref[...]                        # (H, In)   torch Linear layout
    b1 = b1_ref[...]                        # (H, 1)
    w2 = w2_ref[...]                        # (Out, H)
    b2 = b2_ref[...]                        # (Out, 1)

    # i_l + ReLU:   h^T = W1 @ x^T + b1
    h_t = jnp.dot(w1, x_t, preferred_element_type=jnp.float32) + b1
    h_t = jnp.maximum(h_t, 0.0)

    # o_l:          logits^T = W2 @ h^T + b2
    logits_t = jnp.dot(w2, h_t, preferred_element_type=jnp.float32) + b2

    # softmax over the output-neuron axis (torch dim=1) == sublane axis here.
    m = jnp.max(logits_t, axis=0, keepdims=True)
    e = jnp.exp(logits_t - m)
    denom = jnp.sum(e, axis=0, keepdims=True)
    # approx=False keeps the 1e-5 self-test tolerance; approx=True (EUP vrcp)
    # is a valid micro-opt if ~1e-3 relative error on the norm is acceptable.
    oT_ref[...] = (e * pl.reciprocal(denom, approx=False)).astype(oT_ref.dtype)


def _pick_batch_tile(batch):
    # Lane-dense tile: multiple of 128, at most 512; shrink so small batches
    # still get >=2 grid steps when possible (v7x: both TCs get work).
    tb = 512
    while tb > 128 and batch <= tb:
        tb //= 2
    return tb


@jax.jit
def position_forward(x, w1, b1, w2, b2):
    """x: (B, In).  Torch-layout params: w1 (16, In), b1 (16,), w2 (Out, 16), b2 (Out,)."""
    B, In = x.shape
    H = w1.shape[0]
    Out = w2.shape[0]

    TB = _pick_batch_tile(B)
    B_pad = pl.cdiv(B, TB) * TB
    grid = (B_pad // TB,)

    # Layout plumbing: pad batch to a tile multiple and put it on the lane axis.
    x_t = jnp.pad(x, ((0, B_pad - B), (0, 0))).T          # (In, B_pad)
    b1c = b1.reshape(H, 1)
    b2c = b2.reshape(Out, 1)

    # Explicit VMEM budget (double-buffered x/out tiles + resident weights),
    # with 2x margin, clamped to the 32 MiB scoped default (safe on v7x 64 MiB).
    vmem_est = 4 * 2 * (In * TB + Out * TB + H * In + Out * H + H + Out)
    vmem_limit = int(min(max(2 * vmem_est, 4 << 20), 32 << 20))

    out_t = pl.pallas_call(
        position_kernel,
        out_shape=jax.ShapeDtypeStruct((Out, B_pad), jnp.float32),
        grid_spec=pltpu.PrefetchScalarGridSpec(
            num_scalar_prefetch=0,
            grid=grid,
            in_specs=[
                pl.BlockSpec((In, TB), lambda i: (0, i)),   # x^T batch tile
                pl.BlockSpec((H, In), lambda i: (0, 0)),    # W1 (resident)
                pl.BlockSpec((H, 1), lambda i: (0, 0)),     # b1 (resident)
                pl.BlockSpec((Out, H), lambda i: (0, 0)),   # W2 (resident)
                pl.BlockSpec((Out, 1), lambda i: (0, 0)),   # b2 (resident)
            ],
            out_specs=pl.BlockSpec((Out, TB), lambda i: (0, i)),
        ),
        compiler_params=pltpu.CompilerParams(
            dimension_semantics=("parallel",),
            vmem_limit_bytes=vmem_limit,
        ),
    )(x_t, w1, b1c, w2, b2c)

    # Back to (B, Out); drop the batch padding.
    return out_t.T[:B]


def init_params(key, input_neurons, output_neurons, hidden=HIDDEN):
    """Deterministic init mimicking nn.Linear's uniform(-1/sqrt(fan_in), +), torch layout."""
    k1, k2, k3, k4 = jax.random.split(key, 4)
    lim1 = 1.0 / jnp.sqrt(jnp.float32(input_neurons))
    lim2 = 1.0 / jnp.sqrt(jnp.float32(hidden))
    w1 = jax.random.uniform(k1, (hidden, input_neurons), jnp.float32, -lim1, lim1)
    b1 = jax.random.uniform(k2, (hidden,), jnp.float32, -lim1, lim1)
    w2 = jax.random.uniform(k3, (output_neurons, hidden), jnp.float32, -lim2, lim2)
    b2 = jax.random.uniform(k4, (output_neurons,), jnp.float32, -lim2, lim2)
    return w1, b1, w2, b2


def reference(x, w1, b1, w2, b2):
    h = jnp.maximum(x @ w1.T + b1, 0.0)
    return jax.nn.softmax(h @ w2.T + b2, axis=1)


if __name__ == "__main__":
    key = jax.random.PRNGKey(0)
    kx, kp, kx2 = jax.random.split(key, 3)

    input_neurons = 32
    output_neurons = 8

    w1, b1, w2, b2 = init_params(kp, input_neurons, output_neurons)

    # Small case (single grid step, padded batch).
    x = jax.random.normal(kx, (8, input_neurons), jnp.float32)
    out = jax.block_until_ready(position_forward(x, w1, b1, w2, b2))
    ref = reference(x, w1, b1, w2, b2)
    assert out.shape == (8, output_neurons)
    assert jnp.allclose(out, ref, atol=1e-5, rtol=1e-5)
    assert jnp.allclose(jnp.sum(out, axis=1), 1.0, atol=1e-5)

    # Larger batch exercising the multi-step pipelined grid + edge padding.
    x2 = jax.random.normal(kx2, (300, input_neurons), jnp.float32)
    out2 = jax.block_until_ready(position_forward(x2, w1, b1, w2, b2))
    ref2 = reference(x2, w1, b1, w2, b2)
    assert out2.shape == (300, output_neurons)
    assert jnp.allclose(out2, ref2, atol=1e-5, rtol=1e-5)
    assert jnp.allclose(jnp.sum(out2, axis=1), 1.0, atol=1e-5)

    print("KERNEL_OK")
</pallas_src>

<mosaic_0001>
module attributes {stable_mosaic.version = 11 : i64} {
  func.func @position_kernel(%arg0: i32, %arg1: memref<32x128xf32, #tpu.memory_space<vmem>>, %arg2: memref<16x32xf32, #tpu.memory_space<vmem>>, %arg3: memref<16x1xf32, #tpu.memory_space<vmem>>, %arg4: memref<8x16xf32, #tpu.memory_space<vmem>>, %arg5: memref<8x1xf32, #tpu.memory_space<vmem>>, %arg6: memref<8x128xf32, #tpu.memory_space<vmem>>) attributes {dimension_semantics = [#tpu.dimension_semantics<parallel>], iteration_bounds = array<i64: 1>, scalar_prefetch = 0 : i64, scratch_operands = 0 : i64, tpu.core_type = #tpu.core_type<tc>, window_params = [{transform_indices = @transform_0, window_bounds = array<i64: 32, 128>}, {pipeline_mode = #tpu.pipeline_mode<synchronous>, transform_indices = @transform_1, window_bounds = array<i64: 16, 32>}, {pipeline_mode = #tpu.pipeline_mode<synchronous>, transform_indices = @transform_2, window_bounds = array<i64: 16, 1>}, {pipeline_mode = #tpu.pipeline_mode<synchronous>, transform_indices = @transform_3, window_bounds = array<i64: 8, 16>}, {pipeline_mode = #tpu.pipeline_mode<synchronous>, transform_indices = @transform_4, window_bounds = array<i64: 8, 1>}, {transform_indices = @transform_5, window_bounds = array<i64: 8, 128>}]} {
    %c0 = arith.constant 0 : index
    %c0_0 = arith.constant 0 : index
    %0 = vector.load %arg1[%c0, %c0_0] : memref<32x128xf32, #tpu.memory_space<vmem>>, vector<32x128xf32>
    %c0_1 = arith.constant 0 : index
    %c0_2 = arith.constant 0 : index
    %1 = vector.load %arg2[%c0_1, %c0_2] : memref<16x32xf32, #tpu.memory_space<vmem>>, vector<16x32xf32>
    %c0_3 = arith.constant 0 : index
    %c0_4 = arith.constant 0 : index
    %2 = vector.load %arg3[%c0_3, %c0_4] : memref<16x1xf32, #tpu.memory_space<vmem>>, vector<16x1xf32>
    %c0_5 = arith.constant 0 : index
    %c0_6 = arith.constant 0 : index
    %3 = vector.load %arg4[%c0_5, %c0_6] : memref<8x16xf32, #tpu.memory_space<vmem>>, vector<8x16xf32>
    %c0_7 = arith.constant 0 : index
    %c0_8 = arith.constant 0 : index
    %4 = vector.load %arg5[%c0_7, %c0_8] : memref<8x1xf32, #tpu.memory_space<vmem>>, vector<8x1xf32>
    %cst = arith.constant dense<0.000000e+00> : vector<16x128xf32>
    %5 = tpu.matmul %1, %0, %cst {dimension_numbers = #tpu.dot_dimension_numbers<[1], [0], [0], [1], [0, 0, 1, 1], [], []>} : vector<16x32xf32>, vector<32x128xf32>, vector<16x128xf32> -> vector<16x128xf32>
    %6 = vector.broadcast %2 : vector<16x1xf32> to vector<16x128xf32>
    %7 = arith.addf %5, %6 : vector<16x128xf32>
    %cst_9 = arith.constant 0.000000e+00 : f32
    %8 = vector.broadcast %cst_9 : f32 to vector<16x128xf32>
    %9 = arith.maximumf %7, %8 : vector<16x128xf32>
    %cst_10 = arith.constant dense<0.000000e+00> : vector<8x128xf32>
    %10 = tpu.matmul %3, %9, %cst_10 {dimension_numbers = #tpu.dot_dimension_numbers<[1], [0], [0], [1], [0, 0, 1, 1], [], []>} : vector<8x16xf32>, vector<16x128xf32>, vector<8x128xf32> -> vector<8x128xf32>
    %11 = vector.broadcast %4 : vector<8x1xf32> to vector<8x128xf32>
    %12 = arith.addf %10, %11 : vector<8x128xf32>
    %cst_11 = arith.constant dense<0xFF800000> : vector<128xf32>
    %13 = vector.multi_reduction <maximumf>, %12, %cst_11 [0] : vector<8x128xf32> to vector<128xf32>
    %14 = vector.shape_cast %13 : vector<128xf32> to vector<1x128xf32>
    %15 = vector.broadcast %14 : vector<1x128xf32> to vector<8x128xf32>
    %16 = arith.subf %12, %15 : vector<8x128xf32>
    %17 = math.exp %16 : vector<8x128xf32>
    %cst_12 = arith.constant dense<0.000000e+00> : vector<128xf32>
    %18 = vector.multi_reduction <add>, %17, %cst_12 [0] : vector<8x128xf32> to vector<128xf32>
    %19 = vector.shape_cast %18 : vector<128xf32> to vector<1x128xf32>
    %20 = tpu.reciprocal %19 : vector<1x128xf32> -> vector<1x128xf32>
    %21 = vector.broadcast %20 : vector<1x128xf32> to vector<8x128xf32>
    %22 = arith.mulf %17, %21 : vector<8x128xf32>
    %c0_13 = arith.constant 0 : index
    %c0_14 = arith.constant 0 : index
    %23 = vector.load %arg6[%c0_13, %c0_14] : memref<8x128xf32, #tpu.memory_space<vmem>>, vector<8x128xf32>
    tpu.vector_store %arg6[%c0_13, %c0_14], %22 {strides = array<i32>} : memref<8x128xf32, #tpu.memory_space<vmem>>, vector<8x128xf32>,
    return
  }
  func.func @transform_0(%arg0: i32) -> (i32, i32) {
    %c0_i32 = arith.constant 0 : i32
    %c0_i32_0 = arith.constant 0 : i32
    return %c0_i32, %arg0 : i32, i32
  }
  func.func @transform_1(%arg0: i32) -> (i32, i32) {
    %c0_i32 = arith.constant 0 : i32
    %c0_i32_0 = arith.constant 0 : i32
    %c0_i32_1 = arith.constant 0 : i32
    return %c0_i32, %c0_i32_0 : i32, i32
  }
  func.func @transform_2(%arg0: i32) -> (i32, i32) {
    %c0_i32 = arith.constant 0 : i32
    %c0_i32_0 = arith.constant 0 : i32
    %c0_i32_1 = arith.constant 0 : i32
    return %c0_i32, %c0_i32_0 : i32, i32
  }
  func.func @transform_3(%arg0: i32) -> (i32, i32) {
    %c0_i32 = arith.constant 0 : i32
    %c0_i32_0 = arith.constant 0 : i32
    %c0_i32_1 = arith.constant 0 : i32
    return %c0_i32, %c0_i32_0 : i32, i32
  }
  func.func @transform_4(%arg0: i32) -> (i32, i32) {
    %c0_i32 = arith.constant 0 : i32
    %c0_i32_0 = arith.constant 0 : i32
    %c0_i32_1 = arith.constant 0 : i32
    return %c0_i32, %c0_i32_0 : i32, i32
  }
  func.func @transform_5(%arg0: i32) -> (i32, i32) {
    %c0_i32 = arith.constant 0 : i32
    %c0_i32_0 = arith.constant 0 : i32
    return %c0_i32, %arg0 : i32, i32
  }
}

</mosaic_0001>

<llo_original>
// kernel: position_forward.1
$region0: #{position_forward.1}
  #allocation0 [shape = 'u32[]', space=smem, size = 0x4, offset = 0x4, fixed_abs, tag = 'smem constant byte address 0x4 - core index']
  #allocation1 [shape = 'u32[144,128]{1,0:T(1,128)}', space=vmem, size = 0x12000, scoped, tag = 'internal scratch']
  %s0 = inlined_call_operand.vmem [shape: f32[32,128], index: 0, kind: input, shape index: {}]
  %s1 = inlined_call_operand.vmem [shape: f32[16,32], index: 1, kind: input, shape index: {}]
  %s2 = inlined_call_operand.vmem [shape: f32[16,1], index: 2, kind: input, shape index: {}]
  %s3 = inlined_call_operand.vmem [shape: f32[8,16], index: 3, kind: input, shape index: {}]
  %s4 = inlined_call_operand.vmem [shape: f32[8,1], index: 4, kind: input, shape index: {}]
  %s5 = inlined_call_operand.vmem [shape: f32[8,128], index: 5, kind: output, shape index: {}]
  %s6 = sld [smem:[#allocation0]]
  $region30: #{position_forward.1} parent=0
    _
  %s8 = ssub.s32 1, %s6
  %s9 = scalar_select 0, %s8, %s6
  // Predicated region
  $region2: #{position_forward.1} parent=0 // pred_check
    _
  $region3: #{position_forward.1} parent=0 // pred_check_branch
    %11 = sbr.rel (0) target = $region5
  $region4: #{position_forward.1} parent=0 // pred_region
    _
  $region5: #{position_forward.1} parent=0 // pred_fallthru
    _
  // Predicated region
  $region6: #{position_forward.1} parent=0 // pred_check
    _
  $region7: #{position_forward.1} parent=0 // pred_check_branch
    %13 = sbr.rel (0) target = $region9
  $region8: #{position_forward.1} parent=0 // pred_region
    _
  $region9: #{position_forward.1} parent=0 // pred_fallthru
    _
  // Predicated region
  $region10: #{position_forward.1} parent=0 // pred_check
    _
  $region11: #{position_forward.1} parent=0 // pred_check_branch
    %15 = sbr.rel (0) target = $region13
  $region12: #{position_forward.1} parent=0 // pred_region
    _
  $region13: #{position_forward.1} parent=0 // pred_fallthru
    _
  // Predicated region
  $region14: #{position_forward.1} parent=0 // pred_check
    _
  $region15: #{position_forward.1} parent=0 // pred_check_branch
    %17 = sbr.rel (0) target = $region17
  $region16: #{position_forward.1} parent=0 // pred_region
    _
  $region17: #{position_forward.1} parent=0 // pred_fallthru
    _
  // Predicated region
  $region18: #{position_forward.1} parent=0 // pred_check
    _
  $region19: #{position_forward.1} parent=0 // pred_check_branch
    %19 = sbr.rel (0) target = $region21
  $region20: #{position_forward.1} parent=0 // pred_region
    _
  $region21: #{position_forward.1} parent=0 // pred_fallthru
    _
  %v20 = vld [vmem:[%s0] sm:$0xff]
  %v21 = vld [vmem:[%s0 + $0x8] sm:$0xff]
  %v22 = vld [vmem:[%s0 + $0x10] sm:$0xff]
  %v23 = vld [vmem:[%s0 + $0x18] sm:$0xff]
  %v24 = vld [vmem:[%s1] sm:$0xff]
  %v25 = vld [vmem:[%s1 + $0x8] sm:$0xff]
  %v26 = vld [vmem:[%s2] sm:$0xff]
  %v27 = vld [vmem:[%s2 + $0x8] sm:$0xff]
  %v28 = vld [vmem:[%s3] sm:$0xff]
  %v29 = vld [vmem:[%s4] sm:$0xff]
  %31 = vset.pattern.permute.xlu0 0
  %32 = vperm.xlu0 %31, %v26
  %v33 = vpop.permute.xlu0 %32
  %36 = vset.pattern.permute.xlu0 0
  %37 = vperm.xlu0 %36, %v27
  %v38 = vpop.permute.xlu0 %37
  %vm40 = vcmask 261120
  %v42 = vsel %vm40, %v24, 0
  %v45 = vsel %vm40, %v25, 0
  %47 = vmatprep.subr.mxu0 0.0
  %48 = vmatpush1.msra.mxu0 0.0
  %49 = vmatprep.subr.mxu0 0.0
  %50 = vmatpush1.msra.mxu0 0.0
  %51 = vmatprep.subr.mxu0 0.0
  %52 = vmatpush1.msra.mxu0 0.0
  %53 = vmatprep.subr.mxu0 0.0
  %54 = vmatpush1.msra.mxu0 0.0
  %55 = vmatprep.subr.mxu0 0.0
  %56 = vmatpush1.msra.mxu0 0.0
  %57 = vmatprep.subr.mxu0 0.0
  %58 = vmatpush1.msra.mxu0 0.0
  %59 = vmatprep.subr.mxu0 0.0
  %60 = vmatpush1.msra.mxu0 0.0
  %61 = vmatprep.subr.mxu0 0.0
  %62 = vmatpush1.msra.mxu0 0.0
  %63 = vmatprep.subr.mxu0 0.0
  %64 = vmatpush1.msra.mxu0 0.0
  %65 = vmatprep.subr.mxu0 0.0
  %66 = vmatpush1.msra.mxu0 0.0
  %67 = vmatprep.subr.mxu0 0.0
  %68 = vmatpush1.msra.mxu0 0.0
  %69 = vmatprep.subr.mxu0 0.0
  %70 = vmatpush1.msra.mxu0 0.0
  %71 = vmatprep.subr.mxu0 0.0
  %72 = vmatpush1.msra.mxu0 %v23
  %73 = vmatprep.subr.mxu0 0.0
  %74 = vmatpush1.msra.mxu0 %v22
  %75 = vmatprep.subr.mxu0 0.0
  %76 = vmatpush1.msra.mxu0 %v21
  %77 = vmatprep.subr.mxu0 0.0
  %78 = vmatpush1.msra.mxu0 %v20
  %79 = vmatprep.subr.mxu0 0.0
  %80 = vmatpush2.msra.mxu0 0.0
  %81 = vmatprep.subr.mxu0 0.0
  %82 = vmatpush2.msra.mxu0 0.0
  %83 = vmatprep.subr.mxu0 0.0
  %84 = vmatpush2.msra.mxu0 0.0
  %85 = vmatprep.subr.mxu0 0.0
  %86 = vmatpush2.msra.mxu0 0.0
  %87 = vmatprep.subr.mxu0 0.0
  %88 = vmatpush2.msra.mxu0 0.0
  %89 = vmatprep.subr.mxu0 0.0
  %90 = vmatpush2.msra.mxu0 0.0
  %91 = vmatprep.subr.mxu0 0.0
  %92 = vmatpush2.msra.mxu0 0.0
  %93 = vmatprep.subr.mxu0 0.0
  %94 = vmatpush2.msra.mxu0 0.0
  %95 = vmatprep.subr.mxu0 0.0
  %96 = vmatpush2.msra.mxu0 0.0
  %97 = vmatprep.subr.mxu0 0.0
  %98 = vmatpush2.msra.mxu0 0.0
  %99 = vmatprep.subr.mxu0 0.0
  %100 = vmatpush2.msra.mxu0 0.0
  %101 = vmatprep.subr.mxu0 0.0
  %102 = vmatpush2.msra.mxu0 0.0
  %103 = vmatprep.subr.mxu0 0.0
  %104 = vmatpush2.msra.mxu0 0.0
  %105 = vmatprep.subr.mxu0 0.0
  %106 = vmatpush2.msra.mxu0 0.0
  %107 = vmatprep.subr.mxu0 0.0
  %108 = vmatpush2.msra.mxu0 0.0
  %109 = vmatprep.subr.mxu0 0.0
  %110 = vmatpush2.msra.mxu0 0.0
  %111 = vmatprep.mubr.f32.mxu0 0.0
  %112 = vmatmul.mubr.f32.gmra.mxu0 %v42
  %v113 = vpop.f32.mrf.mxu0
  %v114 = vadd.f32 %v33, %v113
  %v115 = vpop.f32.mrf.mxu0
  %116 = vmatprep.mubr.f32.mxu0 0.0
  %117 = vmatmul.mubr.f32.gmra.mxu0 %v45
  %v118 = vpop.f32.mrf.mxu0
  %v119 = vadd.f32 %v38, %v118
  %v120 = vpop.f32.mrf.mxu0
  %121 = vdwg.mxu0
  %v122 = vmax.f32 %v114, 0.0
  %v123 = vmax.f32 %v119, 0.0
  %125 = vset.pattern.permute.xlu0 0
  %126 = vperm.xlu0 %125, %v29
  %v127 = vpop.permute.xlu0 %126
  %vm129 = vcmask 130048
  %v131 = vsel %vm129, %v28, 0
  %133 = vmatprep.subr.mxu0 0.0
  %134 = vmatpush1.msra.mxu0 0.0
  %135 = vmatprep.subr.mxu0 0.0
  %136 = vmatpush1.msra.mxu0 0.0
  %137 = vmatprep.subr.mxu0 0.0
  %138 = vmatpush1.msra.mxu0 0.0
  %139 = vmatprep.subr.mxu0 0.0
  %140 = vmatpush1.msra.mxu0 0.0
  %141 = vmatprep.subr.mxu0 0.0
  %142 = vmatpush1.msra.mxu0 0.0
  %143 = vmatprep.subr.mxu0 0.0
  %144 = vmatpush1.msra.mxu0 0.0
  %145 = vmatprep.subr.mxu0 0.0
  %146 = vmatpush1.msra.mxu0 0.0
  %147 = vmatprep.subr.mxu0 0.0
  %148 = vmatpush1.msra.mxu0 0.0
  %149 = vmatprep.subr.mxu0 0.0
  %150 = vmatpush1.msra.mxu0 0.0
  %151 = vmatprep.subr.mxu0 0.0
  %152 = vmatpush1.msra.mxu0 0.0
  %153 = vmatprep.subr.mxu0 0.0
  %154 = vmatpush1.msra.mxu0 0.0
  %155 = vmatprep.subr.mxu0 0.0
  %156 = vmatpush1.msra.mxu0 0.0
  %157 = vmatprep.subr.mxu0 0.0
  %158 = vmatpush1.msra.mxu0 0.0
  %159 = vmatprep.subr.mxu0 0.0
  %160 = vmatpush1.msra.mxu0 0.0
  %161 = vmatprep.subr.mxu0 0.0
  %162 = vmatpush1.msra.mxu0 %v123
  %163 = vmatprep.subr.mxu0 0.0
  %164 = vmatpush1.msra.mxu0 %v122
  %165 = vmatprep.subr.mxu0 0.0
  %166 = vmatpush2.msra.mxu0 0.0
  %167 = vmatprep.subr.mxu0 0.0
  %168 = vmatpush2.msra.mxu0 0.0
  %169 = vmatprep.subr.mxu0 0.0
  %170 = vmatpush2.msra.mxu0 0.0
  %171 = vmatprep.subr.mxu0 0.0
  %172 = vmatpush2.msra.mxu0 0.0
  %173 = vmatprep.subr.mxu0 0.0
  %174 = vmatpush2.msra.mxu0 0.0
  %175 = vmatprep.subr.mxu0 0.0
  %176 = vmatpush2.msra.mxu0 0.0
  %177 = vmatprep.subr.mxu0 0.0
  %178 = vmatpush2.msra.mxu0 0.0
  %179 = vmatprep.subr.mxu0 0.0
  %180 = vmatpush2.msra.mxu0 0.0
  %181 = vmatprep.subr.mxu0 0.0
  %182 = vmatpush2.msra.mxu0 0.0
  %183 = vmatprep.subr.mxu0 0.0
  %184 = vmatpush2.msra.mxu0 0.0
  %185 = vmatprep.subr.mxu0 0.0
  %186 = vmatpush2.msra.mxu0 0.0
  %187 = vmatprep.subr.mxu0 0.0
  %188 = vmatpush2.msra.mxu0 0.0
  %189 = vmatprep.subr.mxu0 0.0
  %190 = vmatpush2.msra.mxu0 0.0
  %191 = vmatprep.subr.mxu0 0.0
  %192 = vmatpush2.msra.mxu0 0.0
  %193 = vmatprep.subr.mxu0 0.0
  %194 = vmatpush2.msra.mxu0 0.0
  %195 = vmatprep.subr.mxu0 0.0
  %196 = vmatpush2.msra.mxu0 0.0
  %197 = vmatprep.mubr.f32.mxu0 0.0
  %198 = vmatmul.mubr.f32.gmra.mxu0 %v131
  %v199 = vpop.f32.mrf.mxu0
  %v200 = vadd.f32 %v127, %v199
  %v201 = vpop.f32.mrf.mxu0
  %202 = vdwg.mxu0
  %v203 = vrot.slane %v200, 4
  %v204 = vmax.f32 %v200, %v203
  %v205 = vrot.slane %v204, 2
  %v206 = vmax.f32 %v204, %v205
  %v207 = vrot.slane %v206, 1
  %v208 = vmax.f32 %v206, %v207
  %v209 = vsub.f32 %v200, %v208
  %v210 = vmul.f32 %v209, 1.442695
  %v211 = vpow.pop %v210
  %v212 = vrot.slane %v211, 4
  %v213 = vadd.f32 %v211, %v212
  %v214 = vrot.slane %v213, 2
  %v215 = vadd.f32 %v213, %v214
  %v216 = vrot.slane %v215, 1
  %v217 = vadd.f32 %v215, %v216
  %v218 = vrcp.pop %v217
  %v219 = vmul.f32 %v211, %v218
  %220 = vst [vmem:[%s5] sm:$0xff] %v219
  // Predicated region
  $region22: #{position_forward.1} parent=0 // pred_check
    _
  $region23: #{position_forward.1} parent=0 // pred_check_branch
    %222 = sbr.rel (0) target = $region25
  $region24: #{position_forward.1} parent=0 // pred_region
    _
  $region25: #{position_forward.1} parent=0 // pred_fallthru
    _
  // Predicated region
  $region26: #{position_forward.1} parent=0 // pred_check
    _
  $region27: #{position_forward.1} parent=0 // pred_check_branch
    %224 = sbr.rel (0) target = $region29
  $region28: #{position_forward.1} parent=0 // pred_region
    _
  $region29: #{position_forward.1} parent=0 // pred_fallthru
    _

</llo_original>
